<compile_context>
chip_gen: v5e
topology: v5e:2x2
jax: 0.10.0
libtpu: 0.0.40
codegen_flags: <defaults>
</compile_context>

<pallas_src>
import jax
import jax.numpy as jnp
from jax.experimental import pallas as pl
from jax.experimental.pallas import tpu as pltpu

IN_FEATURES = 28 * 28   # 784
OUT_FEATURES = 10
N_PAD = 128             # lane-dense padded output width
TM_MAX = 1024           # batch-tile cap: fits every generation's scoped VMEM


def _round_up(x, m):
    return ((x + m - 1) // m) * m


def _linear_kernel(x_ref, wt_ref, b_ref, o_ref):
    # x_ref:  (TM, 784)   VMEM, bf16 (streamed per batch tile, double-buffered)
    # wt_ref: (784, 128)  VMEM, bf16 (resident: constant block index)
    # b_ref:  (1, 128)    VMEM, f32  (resident)
    # o_ref:  (TM, 128)   VMEM, f32  (lane-dense -> unmasked vst)
    acc = jnp.dot(x_ref[...], wt_ref[...], preferred_element_type=jnp.float32)
    o_ref[...] = (acc + b_ref[...]).astype(o_ref.dtype)


def prepare_params(weight, bias, compute_dtype=jnp.bfloat16):
    """One-time: (10,784) W, (10,) b -> (784,128) W.T (compute dtype), (1,128) b (f32)."""
    w_t = jnp.zeros((IN_FEATURES, N_PAD), dtype=compute_dtype)
    w_t = w_t.at[:, :OUT_FEATURES].set(weight.T.astype(compute_dtype))
    b2d = jnp.zeros((1, N_PAD), dtype=jnp.float32)
    b2d = b2d.at[:, :OUT_FEATURES].set(
        bias.reshape(1, OUT_FEATURES).astype(jnp.float32))
    return w_t, b2d


@jax.jit
def linear_mnist_forward(x_nchw, w_t_padded, b_padded):
    """x_nchw: (B, 1, 28, 28). Returns (B, 10) f32 logits."""
    B = x_nchw.shape[0]
    # == torch .view(-1, 784); cast to the compute dtype of the prepared weight.
    x_flat = x_nchw.reshape(B, IN_FEATURES).astype(w_t_padded.dtype)

    # Balanced batch tiling, no wrapper-side padding:
    #  * >= 2 tiles once B >= 16 so v7x can use both TensorCores,
    #  * tiles capped at TM_MAX, rounded up to 8 sublanes,
    #  * ragged last tile handled by Pallas partial edge blocks.
    nt = max(pl.cdiv(B, TM_MAX), 2 if B >= 16 else 1)
    tm = _round_up(pl.cdiv(B, nt), 8)
    grid = (pl.cdiv(B, tm),)

    cost = pl.CostEstimate(
        flops=2 * B * IN_FEATURES * N_PAD,
        transcendentals=0,
        bytes_accessed=(B * IN_FEATURES * x_flat.dtype.itemsize       # x read
                        + B * N_PAD * 4                               # out write
                        + IN_FEATURES * N_PAD * w_t_padded.dtype.itemsize
                        + N_PAD * 4),                                 # bias
    )

    out = pl.pallas_call(
        _linear_kernel,
        out_shape=jax.ShapeDtypeStruct((B, N_PAD), jnp.float32),
        grid_spec=pltpu.PrefetchScalarGridSpec(
            num_scalar_prefetch=0,
            grid=grid,
            in_specs=[
                # x: streamed per batch tile (double-buffered by Pallas).
                pl.BlockSpec((tm, IN_FEATURES), lambda i: (i, 0)),
                # W.T and bias: resident (same block every step -> fetched once).
                pl.BlockSpec((IN_FEATURES, N_PAD), lambda i: (0, 0)),
                pl.BlockSpec((1, N_PAD), lambda i: (0, 0)),
            ],
            out_specs=pl.BlockSpec((tm, N_PAD), lambda i: (i, 0)),
        ),
        compiler_params=pltpu.CompilerParams(
            # Independent batch tiles: shard across both TCs on v7x.
            dimension_semantics=("parallel",),
        ),
        cost_estimate=cost,
    )(x_flat, w_t_padded, b_padded)

    # Keep this slice: it also discards any masked/garbage padded rows/cols.
    return out[:, :OUT_FEATURES]


def init_params(key):
    # nn.Linear default init: U(-1/sqrt(fan_in), 1/sqrt(fan_in)); deterministic here.
    kw, kb = jax.random.split(key)
    bound = 1.0 / jnp.sqrt(jnp.float32(IN_FEATURES))
    weight = jax.random.uniform(
        kw, (OUT_FEATURES, IN_FEATURES), jnp.float32, -bound, bound)
    bias = jax.random.uniform(
        kb, (OUT_FEATURES,), jnp.float32, -bound, bound)
    return weight, bias


if __name__ == "__main__":
    key = jax.random.PRNGKey(0)
    kx, kp = jax.random.split(key)

    B = 2
    x = jax.random.normal(kx, (B, 1, 28, 28), jnp.float32)   # MNIST-like NCHW
    weight, bias = init_params(kp)

    # Pre-transpose / pre-pad / pre-cast the weight once (outside forward).
    w_t_padded, b_padded = prepare_params(weight, bias)

    out = linear_mnist_forward(x, w_t_padded, b_padded)
    out = jax.block_until_ready(out)
    assert out.shape == (B, OUT_FEATURES)

    # Reference in the same precision model as the kernel (bf16 inputs,
    # f32 accumulation) -> tight tolerance.
    x_bf = x.reshape(B, IN_FEATURES).astype(jnp.bfloat16).astype(jnp.float32)
    w_bf = weight.astype(jnp.bfloat16).astype(jnp.float32)
    ref_bf = x_bf @ w_bf.T + bias
    assert jnp.allclose(out, ref_bf, atol=2e-3, rtol=2e-3), "mismatch vs bf16 ref"

    # Sanity vs exact-f32 module semantics (bf16 input cast is the deliberate
    # precision trade from the perf review).
    ref_f32 = x.reshape(B, IN_FEATURES) @ weight.T + bias
    assert jnp.allclose(out, ref_f32, atol=5e-2, rtol=5e-2), "mismatch vs f32 ref"

    print("KERNEL_OK")
</pallas_src>

<mosaic_0001>
module attributes {stable_mosaic.version = 11 : i64} {
  func.func @_linear_kernel(%arg0: i32, %arg1: memref<8x784xbf16, #tpu.memory_space<vmem>>, %arg2: memref<784x128xbf16, #tpu.memory_space<vmem>>, %arg3: memref<1x128xf32, #tpu.memory_space<vmem>>, %arg4: memref<8x128xf32, #tpu.memory_space<vmem>>) attributes {dimension_semantics = [#tpu.dimension_semantics<parallel>], iteration_bounds = array<i64: 1>, scalar_prefetch = 0 : i64, scratch_operands = 0 : i64, tpu.core_type = #tpu.core_type<tc>, window_params = [{transform_indices = @transform_0, window_bounds = array<i64: 8, 784>}, {pipeline_mode = #tpu.pipeline_mode<synchronous>, transform_indices = @transform_1, window_bounds = array<i64: 784, 128>}, {pipeline_mode = #tpu.pipeline_mode<synchronous>, transform_indices = @transform_2, window_bounds = array<i64: 1, 128>}, {transform_indices = @transform_3, window_bounds = array<i64: 8, 128>}]} {
    %c0 = arith.constant 0 : index
    %c0_0 = arith.constant 0 : index
    %0 = vector.load %arg1[%c0, %c0_0] : memref<8x784xbf16, #tpu.memory_space<vmem>>, vector<8x784xbf16>
    %c0_1 = arith.constant 0 : index
    %c0_2 = arith.constant 0 : index
    %1 = vector.load %arg2[%c0_1, %c0_2] : memref<784x128xbf16, #tpu.memory_space<vmem>>, vector<784x128xbf16>
    %cst = arith.constant dense<0.000000e+00> : vector<8x128xf32>
    %2 = tpu.matmul %0, %1, %cst {dimension_numbers = #tpu.dot_dimension_numbers<[1], [0], [0], [1], [0, 0, 1, 1], [], []>} : vector<8x784xbf16>, vector<784x128xbf16>, vector<8x128xf32> -> vector<8x128xf32>
    %c0_3 = arith.constant 0 : index
    %c0_4 = arith.constant 0 : index
    %3 = vector.load %arg3[%c0_3, %c0_4] : memref<1x128xf32, #tpu.memory_space<vmem>>, vector<1x128xf32>
    %4 = vector.broadcast %3 : vector<1x128xf32> to vector<8x128xf32>
    %5 = arith.addf %2, %4 : vector<8x128xf32>
    %c0_5 = arith.constant 0 : index
    %c0_6 = arith.constant 0 : index
    %6 = vector.load %arg4[%c0_5, %c0_6] : memref<8x128xf32, #tpu.memory_space<vmem>>, vector<8x128xf32>
    tpu.vector_store %arg4[%c0_5, %c0_6], %5 {strides = array<i32>} : memref<8x128xf32, #tpu.memory_space<vmem>>, vector<8x128xf32>,
    return
  }
  func.func @transform_0(%arg0: i32) -> (i32, i32) {
    %c0_i32 = arith.constant 0 : i32
    %c0_i32_0 = arith.constant 0 : i32
    return %arg0, %c0_i32 : i32, i32
  }
  func.func @transform_1(%arg0: i32) -> (i32, i32) {
    %c0_i32 = arith.constant 0 : i32
    %c0_i32_0 = arith.constant 0 : i32
    %c0_i32_1 = arith.constant 0 : i32
    return %c0_i32, %c0_i32_0 : i32, i32
  }
  func.func @transform_2(%arg0: i32) -> (i32, i32) {
    %c0_i32 = arith.constant 0 : i32
    %c0_i32_0 = arith.constant 0 : i32
    %c0_i32_1 = arith.constant 0 : i32
    return %c0_i32, %c0_i32_0 : i32, i32
  }
  func.func @transform_3(%arg0: i32) -> (i32, i32) {
    %c0_i32 = arith.constant 0 : i32
    %c0_i32_0 = arith.constant 0 : i32
    return %arg0, %c0_i32 : i32, i32
  }
}

</mosaic_0001>

<llo_original>
// kernel: linear_mnist_forward.1
$region0: #{linear_mnist_forward.1}
  #allocation0 [shape = 'u32[]', space=smem, size = 0x4, offset = 0x4, fixed_abs, tag = 'smem constant byte address 0x4 - core index']
  #allocation1 [shape = 'u32[72,128]{1,0:T(1,128)}', space=vmem, size = 0x9000, scoped, tag = 'internal scratch']
  %s0 = inlined_call_operand.vmem [shape: bf16[2,784], index: 0, kind: input, shape index: {}]
  %s1 = inlined_call_operand.hbm [shape: bf16[784,128], index: 1, kind: input, shape index: {}]
  %s2 = inlined_call_operand.vmem [shape: f32[1,128], index: 2, kind: input, shape index: {}]
  %s3 = inlined_call_operand.hbm [shape: f32[2,128], index: 3, kind: output, shape index: {}]
  %s4 = sld [smem:[#allocation0]]
  $region26: #{linear_mnist_forward.1} parent=0
    _
  %s6 = ssub.s32 1, %s4
  %s7 = scalar_select 0, %s6, %s4
  $region1: #{linear_mnist_forward.1} parent=0
    #allocation2 [shape = 'u8[200704]{0}', space=vmem, size = 0x31000, scoped, tag = 'input window, operand 1, single buffered']
    #allocation3 [shape = 's32[1]{0}', space=sflag, size = 0x4, scoped, tag = 'scoped memory for linear_mnist_forward.1']
    #allocation4 [shape = 's32[1]{0}', space=sflag, size = 0x4, scoped, tag = 'scoped memory for linear_mnist_forward.1']
    #allocation5 [shape = 'u8[4096]{0}', space=vmem, size = 0x1000, scoped, tag = 'output window, operand 0, single buffered']
    %8 = vsyncpa [#allocation3], 0
    %9 = vsyncpa [#allocation4], 0
    // Predicated region
    $region2: #{linear_mnist_forward.1} parent=1 // pred_check
      _
    $region3: #{linear_mnist_forward.1} parent=1 // pred_check_branch
      %11 = sbr.rel (0) target = $region5
    $region4: #{linear_mnist_forward.1} parent=1 // pred_region
      _
    $region5: #{linear_mnist_forward.1} parent=1 // pred_fallthru
      _
    // Predicated region
    $region6: #{linear_mnist_forward.1} parent=1 // pred_check
      _
    $region7: #{linear_mnist_forward.1} parent=1 // pred_check_branch
      %13 = sbr.rel (0) target = $region9
    $region8: #{linear_mnist_forward.1} parent=1 // pred_region
      %15 = vsyncadd [#allocation3], 0
      %s16 = sshll.u32 %s1, 4
      %s17 = int_to_ptr.hbm [resolvable:$true] %s16
      %s18 = sshll.u32 [#allocation2], 4
      %s19 = int_to_ptr.vmem [resolvable:$true] %s18
      %24 = dma.hbm_to_vmem [thread:$0]  %s17, 6272, %s19, [#allocation3], 64, 64, 4
    $region9: #{linear_mnist_forward.1} parent=1 // pred_fallthru
      _
    // Predicated region
    $region10: #{linear_mnist_forward.1} parent=1 // pred_check
      _
    $region11: #{linear_mnist_forward.1} parent=1 // pred_check_branch
      %26 = sbr.rel (0) target = $region13
    $region12: #{linear_mnist_forward.1} parent=1 // pred_region
      _
    $region13: #{linear_mnist_forward.1} parent=1 // pred_fallthru
      _
    // Predicated region
    $region14: #{linear_mnist_forward.1} parent=1 // pred_check
      _
    $region15: #{linear_mnist_forward.1} parent=1 // pred_check_branch
      %28 = sbr.rel (0) target = $region17
    $region16: #{linear_mnist_forward.1} parent=1 // pred_region
      %30 = dma.done [#allocation3], 6272
    $region17: #{linear_mnist_forward.1} parent=1 // pred_fallthru
      _
    %v32 = vld [vmem:[%s0] sm:$0x7f]
    %v33 = vld [vmem:[%s0 + $0x7] sm:$0x7f]
    %v34 = vld [vmem:[%s0 + $0xe] sm:$0x7f]
    %v35 = vld [vmem:[%s0 + $0x15] sm:$0x7f]
    %v36 = vld [vmem:[#allocation2] sm:$0xf]
    %v37 = vld [vmem:[#allocation2 + $0x4] sm:$0xf]
    %v38 = vld [vmem:[#allocation2 + $0x8] sm:$0xf]
    %v39 = vld [vmem:[#allocation2 + $0xc] sm:$0xf]
    %v40 = vld [vmem:[#allocation2 + $0x10] sm:$0xf]
    %v41 = vld [vmem:[#allocation2 + $0x14] sm:$0xf]
    %v42 = vld [vmem:[#allocation2 + $0x18] sm:$0xf]
    %v43 = vld [vmem:[#allocation2 + $0x1c] sm:$0xf]
    %v44 = vld [vmem:[#allocation2 + $0x20] sm:$0xf]
    %v45 = vld [vmem:[#allocation2 + $0x24] sm:$0xf]
    %v46 = vld [vmem:[#allocation2 + $0x28] sm:$0xf]
    %v47 = vld [vmem:[#allocation2 + $0x2c] sm:$0xf]
    %v48 = vld [vmem:[#allocation2 + $0x30] sm:$0xf]
    %v49 = vld [vmem:[#allocation2 + $0x34] sm:$0xf]
    %v50 = vld [vmem:[#allocation2 + $0x38] sm:$0xf]
    %v51 = vld [vmem:[#allocation2 + $0x3c] sm:$0xf]
    %v52 = vld [vmem:[#allocation2 + $0x40] sm:$0xf]
    %v53 = vld [vmem:[#allocation2 + $0x44] sm:$0xf]
    %v54 = vld [vmem:[#allocation2 + $0x48] sm:$0xf]
    %v55 = vld [vmem:[#allocation2 + $0x4c] sm:$0xf]
    %v56 = vld [vmem:[#allocation2 + $0x50] sm:$0xf]
    %v57 = vld [vmem:[#allocation2 + $0x54] sm:$0xf]
    %v58 = vld [vmem:[#allocation2 + $0x58] sm:$0xf]
    %v59 = vld [vmem:[#allocation2 + $0x5c] sm:$0xf]
    %v60 = vld [vmem:[#allocation2 + $0x60] sm:$0xf]
    %v61 = vld [vmem:[#allocation2 + $0x64] sm:$0xf]
    %v62 = vld [vmem:[#allocation2 + $0x68] sm:$0xf]
    %v63 = vld [vmem:[#allocation2 + $0x6c] sm:$0xf]
    %v64 = vld [vmem:[#allocation2 + $0x70] sm:$0xf]
    %v65 = vld [vmem:[#allocation2 + $0x74] sm:$0xf]
    %v66 = vld [vmem:[#allocation2 + $0x78] sm:$0xf]
    %v67 = vld [vmem:[#allocation2 + $0x7c] sm:$0xf]
    %v68 = vld [vmem:[#allocation2 + $0x80] sm:$0xf]
    %v69 = vld [vmem:[#allocation2 + $0x84] sm:$0xf]
    %v70 = vld [vmem:[#allocation2 + $0x88] sm:$0xf]
    %v71 = vld [vmem:[#allocation2 + $0x8c] sm:$0xf]
    %v72 = vld [vmem:[#allocation2 + $0x90] sm:$0xf]
    %v73 = vld [vmem:[#allocation2 + $0x94] sm:$0xf]
    %v74 = vld [vmem:[#allocation2 + $0x98] sm:$0xf]
    %v75 = vld [vmem:[#allocation2 + $0x9c] sm:$0xf]
    %v76 = vld [vmem:[#allocation2 + $0xa0] sm:$0xf]
    %v77 = vld [vmem:[#allocation2 + $0xa4] sm:$0xf]
    %v78 = vld [vmem:[#allocation2 + $0xa8] sm:$0xf]
    %v79 = vld [vmem:[#allocation2 + $0xac] sm:$0xf]
    %v80 = vld [vmem:[#allocation2 + $0xb0] sm:$0xf]
    %v81 = vld [vmem:[#allocation2 + $0xb4] sm:$0xf]
    %v82 = vld [vmem:[#allocation2 + $0xb8] sm:$0xf]
    %v83 = vld [vmem:[#allocation2 + $0xbc] sm:$0xf]
    %v84 = vld [vmem:[#allocation2 + $0xc0] sm:$0xf]
    %v85 = vld [vmem:[#allocation2 + $0xc4] sm:$0xf]
    %v86 = vld [vmem:[#allocation2 + $0xc8] sm:$0xf]
    %v87 = vld [vmem:[#allocation2 + $0xcc] sm:$0xf]
    %v88 = vld [vmem:[#allocation2 + $0xd0] sm:$0xf]
    %v89 = vld [vmem:[#allocation2 + $0xd4] sm:$0xf]
    %v90 = vld [vmem:[#allocation2 + $0xd8] sm:$0xf]
    %v91 = vld [vmem:[#allocation2 + $0xdc] sm:$0xf]
    %v92 = vld [vmem:[#allocation2 + $0xe0] sm:$0xf]
    %v93 = vld [vmem:[#allocation2 + $0xe4] sm:$0xf]
    %v94 = vld [vmem:[#allocation2 + $0xe8] sm:$0xf]
    %v95 = vld [vmem:[#allocation2 + $0xec] sm:$0xf]
    %v96 = vld [vmem:[#allocation2 + $0xf0] sm:$0xf]
    %v97 = vld [vmem:[#allocation2 + $0xf4] sm:$0xf]
    %v98 = vld [vmem:[#allocation2 + $0xf8] sm:$0xf]
    %v99 = vld [vmem:[#allocation2 + $0xfc] sm:$0xf]
    %v100 = vld [vmem:[#allocation2 + $0x100] sm:$0xf]
    %v101 = vld [vmem:[#allocation2 + $0x104] sm:$0xf]
    %v102 = vld [vmem:[#allocation2 + $0x108] sm:$0xf]
    %v103 = vld [vmem:[#allocation2 + $0x10c] sm:$0xf]
    %v104 = vld [vmem:[#allocation2 + $0x110] sm:$0xf]
    %v105 = vld [vmem:[#allocation2 + $0x114] sm:$0xf]
    %v106 = vld [vmem:[#allocation2 + $0x118] sm:$0xf]
    %v107 = vld [vmem:[#allocation2 + $0x11c] sm:$0xf]
    %v108 = vld [vmem:[#allocation2 + $0x120] sm:$0xf]
    %v109 = vld [vmem:[#allocation2 + $0x124] sm:$0xf]
    %v110 = vld [vmem:[#allocation2 + $0x128] sm:$0xf]
    %v111 = vld [vmem:[#allocation2 + $0x12c] sm:$0xf]
    %v112 = vld [vmem:[#allocation2 + $0x130] sm:$0xf]
    %v113 = vld [vmem:[#allocation2 + $0x134] sm:$0xf]
    %v114 = vld [vmem:[#allocation2 + $0x138] sm:$0xf]
    %v115 = vld [vmem:[#allocation2 + $0x13c] sm:$0xf]
    %v116 = vld [vmem:[#allocation2 + $0x140] sm:$0xf]
    %v117 = vld [vmem:[#allocation2 + $0x144] sm:$0xf]
    %v118 = vld [vmem:[#allocation2 + $0x148] sm:$0xf]
    %v119 = vld [vmem:[#allocation2 + $0x14c] sm:$0xf]
    %v120 = vld [vmem:[#allocation2 + $0x150] sm:$0xf]
    %v121 = vld [vmem:[#allocation2 + $0x154] sm:$0xf]
    %v122 = vld [vmem:[#allocation2 + $0x158] sm:$0xf]
    %v123 = vld [vmem:[#allocation2 + $0x15c] sm:$0xf]
    %v124 = vld [vmem:[#allocation2 + $0x160] sm:$0xf]
    %v125 = vld [vmem:[#allocation2 + $0x164] sm:$0xf]
    %v126 = vld [vmem:[#allocation2 + $0x168] sm:$0xf]
    %v127 = vld [vmem:[#allocation2 + $0x16c] sm:$0xf]
    %v128 = vld [vmem:[#allocation2 + $0x170] sm:$0xf]
    %v129 = vld [vmem:[#allocation2 + $0x174] sm:$0xf]
    %v130 = vld [vmem:[#allocation2 + $0x178] sm:$0xf]
    %v131 = vld [vmem:[#allocation2 + $0x17c] sm:$0xf]
    %v132 = vld [vmem:[#allocation2 + $0x180] sm:$0xf]
    %v133 = vld [vmem:[#allocation2 + $0x184] sm:$0xf]
    %v134 = vld [vmem:[%s2] sm:$0x1]
    %v136 = vperm.slane %v134, 0
    %139 = vst [vmem:[#allocation1] ss:$9 sm:$0xff] %v32
    %s141 = scalar_lea.vmem [#allocation1], 1
    %142 = vst [vmem:[%s141] ss:$9 sm:$0xff] %v33
    %s144 = scalar_lea.vmem [#allocation1], 2
    %145 = vst [vmem:[%s144] ss:$9 sm:$0xff] %v34
    %s147 = scalar_lea.vmem [#allocation1], 3
    %148 = vst [vmem:[%s147] ss:$9 sm:$0xff] %v35
    %v149 = vld [vmem:[#allocation1] sm:$0xff]
    %v150 = vld [vmem:[#allocation1 + $0x9] sm:$0xff]
    %v151 = vld [vmem:[#allocation1 + $0x12] sm:$0xff]
    %v152 = vld [vmem:[#allocation1 + $0x1b] sm:$0xff]
    %v153 = vld [vmem:[#allocation1 + $0x24] sm:$0xff]
    %v154 = vld [vmem:[#allocation1 + $0x2d] sm:$0xff]
    %v155 = vld [vmem:[#allocation1 + $0x36] sm:$0xff]
    %v260 = vunpack.c.l.b16 %v36
    %v261 = vunpack.c.l.b16 %v37
    %v262 = vunpack.c.l.b16 %v38
    %v263 = vunpack.c.l.b16 %v39
    %v264 = vunpack.c.l.b16 %v40
    %v265 = vunpack.c.l.b16 %v41
    %v266 = vunpack.c.l.b16 %v42
    %v267 = vunpack.c.l.b16 %v43
    %v268 = vunpack.c.l.b16 %v44
    %v269 = vunpack.c.l.b16 %v45
    %v270 = vunpack.c.l.b16 %v46
    %v271 = vunpack.c.l.b16 %v47
    %v272 = vunpack.c.l.b16 %v48
    %v273 = vunpack.c.l.b16 %v49
    %v274 = vunpack.c.l.b16 %v50
    %v275 = vunpack.c.l.b16 %v51
    %v276 = vunpack.c.l.b16 %v52
    %v277 = vunpack.c.l.b16 %v53
    %v278 = vunpack.c.l.b16 %v54
    %v279 = vunpack.c.l.b16 %v55
    %v280 = vunpack.c.l.b16 %v56
    %v281 = vunpack.c.l.b16 %v57
    %v282 = vunpack.c.l.b16 %v58
    %v283 = vunpack.c.l.b16 %v59
    %v284 = vunpack.c.l.b16 %v60
    %v285 = vunpack.c.l.b16 %v61
    %v286 = vunpack.c.l.b16 %v62
    %v287 = vunpack.c.l.b16 %v63
    %v288 = vunpack.c.l.b16 %v64
    %v289 = vunpack.c.l.b16 %v65
    %v290 = vunpack.c.l.b16 %v66
    %v291 = vunpack.c.l.b16 %v67
    %v292 = vunpack.c.l.b16 %v68
    %v293 = vunpack.c.l.b16 %v69
    %v294 = vunpack.c.l.b16 %v70
    %v295 = vunpack.c.l.b16 %v71
    %v296 = vunpack.c.l.b16 %v72
    %v297 = vunpack.c.l.b16 %v73
    %v298 = vunpack.c.l.b16 %v74
    %v299 = vunpack.c.l.b16 %v75
    %v300 = vunpack.c.l.b16 %v76
    %v301 = vunpack.c.l.b16 %v77
    %v302 = vunpack.c.l.b16 %v78
    %v303 = vunpack.c.l.b16 %v79
    %v304 = vunpack.c.l.b16 %v80
    %v305 = vunpack.c.l.b16 %v81
    %v306 = vunpack.c.l.b16 %v82
    %v307 = vunpack.c.l.b16 %v83
    %v308 = vunpack.c.l.b16 %v84
    %v309 = vunpack.c.l.b16 %v85
    %v310 = vunpack.c.l.b16 %v86
    %v311 = vunpack.c.l.b16 %v87
    %v312 = vunpack.c.l.b16 %v88
    %v313 = vunpack.c.l.b16 %v89
    %v314 = vunpack.c.l.b16 %v90
    %v315 = vunpack.c.l.b16 %v91
    %v316 = vunpack.c.l.b16 %v92
    %v317 = vunpack.c.l.b16 %v93
    %v318 = vunpack.c.l.b16 %v94
    %v319 = vunpack.c.l.b16 %v95
    %v320 = vunpack.c.l.b16 %v96
    %v321 = vunpack.c.l.b16 %v97
    %v322 = vunpack.c.l.b16 %v98
    %v323 = vunpack.c.l.b16 %v99
    %v324 = vunpack.c.l.b16 %v100
    %v325 = vunpack.c.l.b16 %v101
    %v326 = vunpack.c.l.b16 %v102
    %v327 = vunpack.c.l.b16 %v103
    %v328 = vunpack.c.l.b16 %v104
    %v329 = vunpack.c.l.b16 %v105
    %v330 = vunpack.c.l.b16 %v106
    %v331 = vunpack.c.l.b16 %v107
    %v332 = vunpack.c.l.b16 %v108
    %v333 = vunpack.c.l.b16 %v109
    %v334 = vunpack.c.l.b16 %v110
    %v335 = vunpack.c.l.b16 %v111
    %v336 = vunpack.c.l.b16 %v112
    %v337 = vunpack.c.l.b16 %v113
    %v338 = vunpack.c.l.b16 %v114
    %v339 = vunpack.c.l.b16 %v115
    %v340 = vunpack.c.l.b16 %v116
    %v341 = vunpack.c.l.b16 %v117
    %v342 = vunpack.c.l.b16 %v118
    %v343 = vunpack.c.l.b16 %v119
    %v344 = vunpack.c.l.b16 %v120
    %v345 = vunpack.c.l.b16 %v121
    %v346 = vunpack.c.l.b16 %v122
    %v347 = vunpack.c.l.b16 %v123
    %v348 = vunpack.c.l.b16 %v124
    %v349 = vunpack.c.l.b16 %v125
    %v350 = vunpack.c.l.b16 %v126
    %v351 = vunpack.c.l.b16 %v127
    %v352 = vunpack.c.l.b16 %v128
    %v353 = vunpack.c.l.b16 %v129
    %v354 = vunpack.c.l.b16 %v130
    %v355 = vunpack.c.l.b16 %v131
    %v356 = vunpack.c.l.b16 %v132
    %v357 = vunpack.c.l.b16 %v133
    %v358 = vpack.c.b16 %v261, %v260
    %v359 = vpack.c.b16 %v263, %v262
    %v360 = vpack.c.b16 %v265, %v264
    %v361 = vpack.c.b16 %v267, %v266
    %v362 = vpack.c.b16 %v269, %v268
    %v363 = vpack.c.b16 %v271, %v270
    %v364 = vpack.c.b16 %v273, %v272
    %v365 = vpack.c.b16 %v275, %v274
    %v366 = vpack.c.b16 %v277, %v276
    %v367 = vpack.c.b16 %v279, %v278
    %v368 = vpack.c.b16 %v281, %v280
    %v369 = vpack.c.b16 %v283, %v282
    %v370 = vpack.c.b16 %v285, %v284
    %v371 = vpack.c.b16 %v287, %v286
    %v372 = vpack.c.b16 %v289, %v288
    %v373 = vpack.c.b16 %v291, %v290
    %v374 = vpack.c.b16 %v293, %v292
    %v375 = vpack.c.b16 %v295, %v294
    %v376 = vpack.c.b16 %v297, %v296
    %v377 = vpack.c.b16 %v299, %v298
    %v378 = vpack.c.b16 %v301, %v300
    %v379 = vpack.c.b16 %v303, %v302
    %v380 = vpack.c.b16 %v305, %v304
    %v381 = vpack.c.b16 %v307, %v306
    %v382 = vpack.c.b16 %v309, %v308
    %v383 = vpack.c.b16 %v311, %v310
    %v384 = vpack.c.b16 %v313, %v312
    %v385 = vpack.c.b16 %v315, %v314
    %v386 = vpack.c.b16 %v317, %v316
    %v387 = vpack.c.b16 %v319, %v318
    %v388 = vpack.c.b16 %v321, %v320
    %v389 = vpack.c.b16 %v323, %v322
    %v390 = vpack.c.b16 %v325, %v324
    %v391 = vpack.c.b16 %v327, %v326
    %v392 = vpack.c.b16 %v329, %v328
    %v393 = vpack.c.b16 %v331, %v330
    %v394 = vpack.c.b16 %v333, %v332
    %v395 = vpack.c.b16 %v335, %v334
    %v396 = vpack.c.b16 %v337, %v336
    %v397 = vpack.c.b16 %v339, %v338
    %v398 = vpack.c.b16 %v341, %v340
    %v399 = vpack.c.b16 %v343, %v342
    %v400 = vpack.c.b16 %v345, %v344
    %v401 = vpack.c.b16 %v347, %v346
    %v402 = vpack.c.b16 %v349, %v348
    %v403 = vpack.c.b16 %v351, %v350
    %v404 = vpack.c.b16 %v353, %v352
    %v405 = vpack.c.b16 %v355, %v354
    %v406 = vpack.c.b16 %v357, %v356
    %vm456 = vcmask 130048
    %v457 = vsel %vm456, %v155, 0
    %459 = vmatpush.bf16.msra.mxu0 %v365
    %460 = vmatpush.bf16.msra.mxu0 %v364
    %461 = vmatpush.bf16.msra.mxu0 %v363
    %462 = vmatpush.bf16.msra.mxu0 %v362
    %463 = vmatpush.bf16.msra.mxu0 %v361
    %464 = vmatpush.bf16.msra.mxu0 %v360
    %465 = vmatpush.bf16.msra.mxu0 %v359
    %466 = vmatpush.bf16.msra.mxu0 %v358
    %467 = vmatmul.bf16.gmra.mxu0 %v149
    %v468 = vpop.f32.mrf.mxu0
    %v469 = vadd.f32 %v136, %v468
    %v470 = vpop.f32.mrf.mxu0
    %471 = vdwg.mxu0
    %472 = vmatpush.bf16.msra.mxu0 %v373
    %473 = vmatpush.bf16.msra.mxu0 %v372
    %474 = vmatpush.bf16.msra.mxu0 %v371
    %475 = vmatpush.bf16.msra.mxu0 %v370
    %476 = vmatpush.bf16.msra.mxu0 %v369
    %477 = vmatpush.bf16.msra.mxu0 %v368
    %478 = vmatpush.bf16.msra.mxu0 %v367
    %479 = vmatpush.bf16.msra.mxu0 %v366
    %480 = vmatmul.bf16.gmra.mxu0 %v150
    %v481 = vpop.f32.mrf.mxu0
    %v482 = vadd.f32 %v469, %v481
    %v483 = vpop.f32.mrf.mxu0
    %484 = vdwg.mxu0
    %485 = vmatpush.bf16.msra.mxu0 %v381
    %486 = vmatpush.bf16.msra.mxu0 %v380
    %487 = vmatpush.bf16.msra.mxu0 %v379
    %488 = vmatpush.bf16.msra.mxu0 %v378
    %489 = vmatpush.bf16.msra.mxu0 %v377
    %490 = vmatpush.bf16.msra.mxu0 %v376
    %491 = vmatpush.bf16.msra.mxu0 %v375
    %492 = vmatpush.bf16.msra.mxu0 %v374
    %493 = vmatmul.bf16.gmra.mxu0 %v151
    %v494 = vpop.f32.mrf.mxu0
    %v495 = vadd.f32 %v482, %v494
    %v496 = vpop.f32.mrf.mxu0
    %497 = vdwg.mxu0
    %498 = vmatpush.bf16.msra.mxu0 %v389
    %499 = vmatpush.bf16.msra.mxu0 %v388
    %500 = vmatpush.bf16.msra.mxu0 %v387
    %501 = vmatpush.bf16.msra.mxu0 %v386
    %502 = vmatpush.bf16.msra.mxu0 %v385
    %503 = vmatpush.bf16.msra.mxu0 %v384
    %504 = vmatpush.bf16.msra.mxu0 %v383
    %505 = vmatpush.bf16.msra.mxu0 %v382
    %506 = vmatmul.bf16.gmra.mxu0 %v152
    %v507 = vpop.f32.mrf.mxu0
    %v508 = vadd.f32 %v495, %v507
    %v509 = vpop.f32.mrf.mxu0
    %510 = vdwg.mxu0
    %511 = vmatpush.bf16.msra.mxu0 %v397
    %512 = vmatpush.bf16.msra.mxu0 %v396
    %513 = vmatpush.bf16.msra.mxu0 %v395
    %514 = vmatpush.bf16.msra.mxu0 %v394
    %515 = vmatpush.bf16.msra.mxu0 %v393
    %516 = vmatpush.bf16.msra.mxu0 %v392
    %517 = vmatpush.bf16.msra.mxu0 %v391
    %518 = vmatpush.bf16.msra.mxu0 %v390
    %519 = vmatmul.bf16.gmra.mxu0 %v153
    %v520 = vpop.f32.mrf.mxu0
    %v521 = vadd.f32 %v508, %v520
    %v522 = vpop.f32.mrf.mxu0
    %523 = vdwg.mxu0
    %524 = vmatpush.bf16.msra.mxu0 %v405
    %525 = vmatpush.bf16.msra.mxu0 %v404
    %526 = vmatpush.bf16.msra.mxu0 %v403
    %527 = vmatpush.bf16.msra.mxu0 %v402
    %528 = vmatpush.bf16.msra.mxu0 %v401
    %529 = vmatpush.bf16.msra.mxu0 %v400
    %530 = vmatpush.bf16.msra.mxu0 %v399
    %531 = vmatpush.bf16.msra.mxu0 %v398
    %532 = vmatmul.bf16.gmra.mxu0 %v154
    %v533 = vpop.f32.mrf.mxu0
    %v534 = vadd.f32 %v521, %v533
    %v535 = vpop.f32.mrf.mxu0
    %536 = vdwg.mxu0
    %537 = vmatpush.bf16.msra.mxu0 0
    %538 = vmatpush.bf16.msra.mxu0 0
    %539 = vmatpush.bf16.msra.mxu0 0
    %540 = vmatpush.bf16.msra.mxu0 0
    %541 = vmatpush.bf16.msra.mxu0 0
    %542 = vmatpush.bf16.msra.mxu0 0
    %543 = vmatpush.bf16.msra.mxu0 0
    %544 = vmatpush.bf16.msra.mxu0 %v406
    %545 = vmatmul.bf16.gmra.mxu0 %v457
    %v546 = vpop.f32.mrf.mxu0
    %v547 = vadd.f32 %v534, %v546
    %v548 = vpop.f32.mrf.mxu0
    %549 = vdwg.mxu0
    %550 = vst [vmem:[#allocation5] sm:$0xff] %v547
    // Predicated region
    $region18: #{linear_mnist_forward.1} parent=1 // pred_check
      _
    $region19: #{linear_mnist_forward.1} parent=1 // pred_check_branch
      %552 = sbr.rel (0) target = $region21
    $region20: #{linear_mnist_forward.1} parent=1 // pred_region
      %554 = vsyncadd [#allocation4], 96
      %s555 = sshll.u32 [#allocation5], 4
      %s556 = int_to_ptr.vmem [resolvable:$true] %s555
      %s557 = sshll.u32 %s3, 4
      %s558 = int_to_ptr.hbm [resolvable:$true] %s557
      %563 = dma.vmem_to_hbm [thread:$0]  %s556, 32, %s558, [#allocation4], 32, 32, 2
    $region21: #{linear_mnist_forward.1} parent=1 // pred_fallthru
      _
    // Predicated region
    $region22: #{linear_mnist_forward.1} parent=1 // pred_check
      _
    $region23: #{linear_mnist_forward.1} parent=1 // pred_check_branch
      %565 = sbr.rel (0) target = $region25
    $region24: #{linear_mnist_forward.1} parent=1 // pred_region
      %567 = dma.done [#allocation4], 128
    $region25: #{linear_mnist_forward.1} parent=1 // pred_fallthru
      _
    %568 = vsyncpa [#allocation3], 1
    %569 = vsyncpa [#allocation4], 1

</llo_original>
